<compile_context>
chip_gen: v7x
topology: tpu7x:2x2x1
jax: 0.10.0
libtpu: 0.0.40
codegen_flags: <defaults>
</compile_context>

<pallas_src>
import jax
import jax.numpy as jnp
from jax.experimental import pallas as pl
from jax.experimental.pallas import tpu as pltpu


def _vae_kernel(
    x_ref,      # [TB, D_in] f32
    eps_ref,    # [TB, L]    f32
    w1_ref,     # [D_in, H]  f32
    b1_ref,     # [1, H]     f32
    w2_ref,     # [H, 2L]    f32   (mu | logvar heads fused)
    b2_ref,     # [1, 2L]    f32
    w3_ref,     # [L, H]     bf16  (decoder weights in bf16)
    b3_ref,     # [1, H]     f32
    w4_ref,     # [H, D_in]  bf16
    b4_ref,     # [1, D_in]  f32
    z_ref,      # out: [TB, L] f32
    loss_ref,   # out: [1, 1]  f32 in SMEM (per-batch-block partial loss)
):
    x = x_ref[...]
    eps = eps_ref[...]
    L = eps.shape[-1]

    # ----- encoder layer 1 (f32 MXU; keeps VALU slot free) -----
    h1 = jnp.dot(x, w1_ref[...], preferred_element_type=jnp.float32) + b1_ref[...]
    h1 = jnp.maximum(h1, 0.0)

    # ----- encoder layer 2 (fused mu|logvar heads, one MXU pass) -----
    mu_lv = jnp.dot(h1, w2_ref[...], preferred_element_type=jnp.float32) + b2_ref[...]
    mu = mu_lv[:, :L]
    logvar = mu_lv[:, L:]

    # ----- reparameterize -----
    std = jnp.exp(0.5 * logvar)
    z = mu + eps * std

    # ----- decoder (bf16 MXU operands; feeds only the scalar loss) -----
    h2 = jnp.dot(z.astype(jnp.bfloat16), w3_ref[...],
                 preferred_element_type=jnp.float32) + b3_ref[...]
    h2 = jnp.maximum(h2, 0.0)
    logits = jnp.dot(h2.astype(jnp.bfloat16), w4_ref[...],
                     preferred_element_type=jnp.float32) + b4_ref[...]
    recon = jax.nn.sigmoid(logits)

    # ----- losses -----
    diff = recon - x
    recon_loss = jnp.sum(diff * diff)             # MSE, reduction='sum'
    var = std * std                               # == exp(logvar) up to f32 rounding
    kl = -0.5 * jnp.sum(1.0 + logvar - mu * mu - var)

    z_ref[...] = z.astype(z_ref.dtype)
    loss_ref[0, 0] = recon_loss + kl              # scalar store to SMEM


def _pick_batch_block(batch, max_tb=2048):
    """Largest sublane-aligned batch block, preferring >= 2 blocks (v7x megacore).

    Per-row live intermediates are ~2.5 KB, so even TB=2048 is ~5-6 MB of VMEM.
    """
    cands = [tb for tb in range(8, min(batch, max_tb) + 1, 8) if batch % tb == 0]
    if not cands:
        return batch                       # tiny / ragged batch: single full block
    multi = [tb for tb in cands if batch // tb >= 2]
    return max(multi) if multi else max(cands)


@jax.jit
def vae_forward(x, eps, params):
    """Full VAE forward in one Pallas kernel.

    x:   [B, D_in] float32
    eps: [B, L]    float32 (standard-normal reparameterization noise)
    Returns (z [B, L], total_loss scalar).
    """
    B, d_in = x.shape
    L = eps.shape[1]
    H = params["w1"].shape[1]

    TB = _pick_batch_block(B)
    nb = B // TB

    # Decoder weights go to bf16 once, outside the kernel (halves their DMA bytes).
    w3 = params["w3"].astype(jnp.bfloat16)
    w4 = params["w4"].astype(jnp.bfloat16)

    const = lambda shape: pl.BlockSpec(shape, lambda i: (0, 0))  # resident weights

    flops = 2 * B * (d_in * H + H * 2 * L + L * H + H * d_in)
    transcendentals = B * (L + d_in)                  # exp(0.5*logvar) + sigmoid
    bytes_accessed = (
        4 * (B * d_in + B * L)                        # x, eps in
        + 4 * (d_in * H + H * 2 * L + 2 * H + 2 * L + d_in)   # f32 weights/biases
        + 2 * (L * H + H * d_in)                      # bf16 decoder weights
        + 4 * (B * L + nb)                            # z, partial losses out
    )

    z, loss_parts = pl.pallas_call(
        _vae_kernel,
        out_shape=(
            jax.ShapeDtypeStruct((B, L), jnp.float32),
            jax.ShapeDtypeStruct((nb, 1), jnp.float32),
        ),
        grid=(nb,),
        in_specs=[
            pl.BlockSpec((TB, d_in), lambda i: (i, 0)),   # x
            pl.BlockSpec((TB, L), lambda i: (i, 0)),      # eps
            const((d_in, H)), const((1, H)),              # w1, b1
            const((H, 2 * L)), const((1, 2 * L)),         # w2, b2 (fused heads)
            const((L, H)), const((1, H)),                 # w3, b3
            const((H, d_in)), const((1, d_in)),           # w4, b4
        ],
        out_specs=(
            pl.BlockSpec((TB, L), lambda i: (i, 0)),
            pl.BlockSpec((1, 1), lambda i: (i, 0), memory_space=pltpu.SMEM),
        ),
        compiler_params=pltpu.CompilerParams(
            dimension_semantics=("parallel",),
        ),
        cost_estimate=pl.CostEstimate(
            flops=flops,
            transcendentals=transcendentals,
            bytes_accessed=bytes_accessed,
        ),
    )(
        x, eps,
        params["w1"], params["b1"],
        params["w2"], params["b2"],
        w3, params["b3"],
        w4, params["b4"],
    )
    return z, jnp.sum(loss_parts)


def _init_params(key, input_dim, hidden_dim, latent_dim):
    """PyTorch-style uniform fan-in init. Weights stored [in, out]."""
    def linear(key, fan_in, fan_out):
        kw, kb = jax.random.split(key)
        bound = 1.0 / jnp.sqrt(fan_in)
        w = jax.random.uniform(kw, (fan_in, fan_out), jnp.float32, -bound, bound)
        b = jax.random.uniform(kb, (1, fan_out), jnp.float32, -bound, bound)
        return w, b

    k1, k2, k3, k4 = jax.random.split(key, 4)
    w1, b1 = linear(k1, input_dim, hidden_dim)
    w2, b2 = linear(k2, hidden_dim, 2 * latent_dim)   # fused [mu | logvar] head
    w3, b3 = linear(k3, latent_dim, hidden_dim)
    w4, b4 = linear(k4, hidden_dim, input_dim)
    return {"w1": w1, "b1": b1, "w2": w2, "b2": b2,
            "w3": w3, "b3": b3, "w4": w4, "b4": b4}


def _reference(x, eps, params):
    """Pure-JAX f32 reference matching the PyTorch module semantics."""
    L = eps.shape[1]
    h1 = jnp.maximum(x @ params["w1"] + params["b1"], 0.0)
    mu_lv = h1 @ params["w2"] + params["b2"]
    mu, logvar = mu_lv[:, :L], mu_lv[:, L:]
    z = mu + eps * jnp.exp(0.5 * logvar)
    h2 = jnp.maximum(z @ params["w3"] + params["b3"], 0.0)
    recon = jax.nn.sigmoid(h2 @ params["w4"] + params["b4"])
    recon_loss = jnp.sum((recon - x) ** 2)
    kl = -0.5 * jnp.sum(1.0 + logvar - mu ** 2 - jnp.exp(logvar))
    return z, recon_loss + kl


if __name__ == "__main__":
    # Shapes implied by the module: input_dim = len(args.scores) = 4,
    # hidden_dim = 256 (fixed), latent_dim = args.node_dim = 32.
    B, INPUT_DIM, HIDDEN_DIM, LATENT_DIM = 8, 4, 256, 32

    key = jax.random.PRNGKey(0)
    k_params, k_x, k_eps = jax.random.split(key, 3)

    params = _init_params(k_params, INPUT_DIM, HIDDEN_DIM, LATENT_DIM)
    x = jax.random.uniform(k_x, (B, INPUT_DIM), jnp.float32)      # scores in [0, 1)
    eps = jax.random.normal(k_eps, (B, LATENT_DIM), jnp.float32)

    z, total_loss = vae_forward(x, eps, params)
    jax.block_until_ready((z, total_loss))

    z_ref, loss_ref = _reference(x, eps, params)
    # Encoder path is f32 -> tight z check.
    assert jnp.allclose(z, z_ref, atol=1e-4, rtol=1e-4), "z mismatch"
    # Decoder path uses bf16 MXU operands -> loss check is correspondingly looser.
    assert jnp.allclose(total_loss, loss_ref, atol=5e-2, rtol=1e-2), "loss mismatch"

    print("KERNEL_OK")
</pallas_src>

<mosaic_0001>
module attributes {stable_mosaic.version = 11 : i64} {
  func.func @_vae_kernel(%arg0: i32, %arg1: memref<8x4xf32, #tpu.memory_space<vmem>>, %arg2: memref<8x32xf32, #tpu.memory_space<vmem>>, %arg3: memref<4x256xf32, #tpu.memory_space<vmem>>, %arg4: memref<1x256xf32, #tpu.memory_space<vmem>>, %arg5: memref<256x64xf32, #tpu.memory_space<vmem>>, %arg6: memref<1x64xf32, #tpu.memory_space<vmem>>, %arg7: memref<32x256xbf16, #tpu.memory_space<vmem>>, %arg8: memref<1x256xf32, #tpu.memory_space<vmem>>, %arg9: memref<256x4xbf16, #tpu.memory_space<vmem>>, %arg10: memref<1x4xf32, #tpu.memory_space<vmem>>, %arg11: memref<8x32xf32, #tpu.memory_space<vmem>>, %arg12: memref<1x1xf32, #tpu.memory_space<smem>>) attributes {dimension_semantics = [#tpu.dimension_semantics<parallel>], iteration_bounds = array<i64: 1>, scalar_prefetch = 0 : i64, scratch_operands = 0 : i64, tpu.core_type = #tpu.core_type<tc>, window_params = [{transform_indices = @transform_0, window_bounds = array<i64: 8, 4>}, {transform_indices = @transform_1, window_bounds = array<i64: 8, 32>}, {pipeline_mode = #tpu.pipeline_mode<synchronous>, transform_indices = @transform_2, window_bounds = array<i64: 4, 256>}, {pipeline_mode = #tpu.pipeline_mode<synchronous>, transform_indices = @transform_3, window_bounds = array<i64: 1, 256>}, {pipeline_mode = #tpu.pipeline_mode<synchronous>, transform_indices = @transform_4, window_bounds = array<i64: 256, 64>}, {pipeline_mode = #tpu.pipeline_mode<synchronous>, transform_indices = @transform_5, window_bounds = array<i64: 1, 64>}, {pipeline_mode = #tpu.pipeline_mode<synchronous>, transform_indices = @transform_6, window_bounds = array<i64: 32, 256>}, {pipeline_mode = #tpu.pipeline_mode<synchronous>, transform_indices = @transform_7, window_bounds = array<i64: 1, 256>}, {pipeline_mode = #tpu.pipeline_mode<synchronous>, transform_indices = @transform_8, window_bounds = array<i64: 256, 4>}, {pipeline_mode = #tpu.pipeline_mode<synchronous>, transform_indices = @transform_9, window_bounds = array<i64: 1, 4>}, {transform_indices = @transform_10, window_bounds = array<i64: 8, 32>}, {transform_indices = @transform_11, window_bounds = array<i64: 1, 1>}]} {
    %c0 = arith.constant 0 : index
    %c0_0 = arith.constant 0 : index
    %0 = vector.load %arg1[%c0, %c0_0] : memref<8x4xf32, #tpu.memory_space<vmem>>, vector<8x4xf32>
    %c0_1 = arith.constant 0 : index
    %c0_2 = arith.constant 0 : index
    %1 = vector.load %arg2[%c0_1, %c0_2] : memref<8x32xf32, #tpu.memory_space<vmem>>, vector<8x32xf32>
    %c0_3 = arith.constant 0 : index
    %c0_4 = arith.constant 0 : index
    %2 = vector.load %arg3[%c0_3, %c0_4] : memref<4x256xf32, #tpu.memory_space<vmem>>, vector<4x256xf32>
    %cst = arith.constant dense<0.000000e+00> : vector<8x256xf32>
    %3 = tpu.matmul %0, %2, %cst {dimension_numbers = #tpu.dot_dimension_numbers<[1], [0], [0], [1], [0, 0, 1, 1], [], []>} : vector<8x4xf32>, vector<4x256xf32>, vector<8x256xf32> -> vector<8x256xf32>
    %c0_5 = arith.constant 0 : index
    %c0_6 = arith.constant 0 : index
    %4 = vector.load %arg4[%c0_5, %c0_6] : memref<1x256xf32, #tpu.memory_space<vmem>>, vector<1x256xf32>
    %5 = vector.broadcast %4 : vector<1x256xf32> to vector<8x256xf32>
    %6 = arith.addf %3, %5 : vector<8x256xf32>
    %cst_7 = arith.constant 0.000000e+00 : f32
    %7 = vector.broadcast %cst_7 : f32 to vector<8x256xf32>
    %8 = arith.maximumf %6, %7 : vector<8x256xf32>
    %c0_8 = arith.constant 0 : index
    %c0_9 = arith.constant 0 : index
    %9 = vector.load %arg5[%c0_8, %c0_9] : memref<256x64xf32, #tpu.memory_space<vmem>>, vector<256x64xf32>
    %cst_10 = arith.constant dense<0.000000e+00> : vector<8x64xf32>
    %10 = tpu.matmul %8, %9, %cst_10 {dimension_numbers = #tpu.dot_dimension_numbers<[1], [0], [0], [1], [0, 0, 1, 1], [], []>} : vector<8x256xf32>, vector<256x64xf32>, vector<8x64xf32> -> vector<8x64xf32>
    %c0_11 = arith.constant 0 : index
    %c0_12 = arith.constant 0 : index
    %11 = vector.load %arg6[%c0_11, %c0_12] : memref<1x64xf32, #tpu.memory_space<vmem>>, vector<1x64xf32>
    %12 = vector.broadcast %11 : vector<1x64xf32> to vector<8x64xf32>
    %13 = arith.addf %10, %12 : vector<8x64xf32>
    %14 = vector.extract_strided_slice %13 {offsets = [0, 0], sizes = [8, 32], strides = [1, 1]} : vector<8x64xf32> to vector<8x32xf32>
    %15 = vector.extract_strided_slice %13 {offsets = [0, 32], sizes = [8, 32], strides = [1, 1]} : vector<8x64xf32> to vector<8x32xf32>
    %cst_13 = arith.constant 5.000000e-01 : f32
    %16 = vector.broadcast %cst_13 : f32 to vector<8x32xf32>
    %17 = arith.mulf %16, %15 : vector<8x32xf32>
    %18 = math.exp %17 : vector<8x32xf32>
    %19 = arith.mulf %1, %18 : vector<8x32xf32>
    %20 = arith.addf %14, %19 : vector<8x32xf32>
    %21 = arith.truncf %20 : vector<8x32xf32> to vector<8x32xbf16>
    %c0_14 = arith.constant 0 : index
    %c0_15 = arith.constant 0 : index
    %22 = vector.load %arg7[%c0_14, %c0_15] : memref<32x256xbf16, #tpu.memory_space<vmem>>, vector<32x256xbf16>
    %cst_16 = arith.constant dense<0.000000e+00> : vector<8x256xf32>
    %23 = tpu.matmul %21, %22, %cst_16 {dimension_numbers = #tpu.dot_dimension_numbers<[1], [0], [0], [1], [0, 0, 1, 1], [], []>} : vector<8x32xbf16>, vector<32x256xbf16>, vector<8x256xf32> -> vector<8x256xf32>
    %c0_17 = arith.constant 0 : index
    %c0_18 = arith.constant 0 : index
    %24 = vector.load %arg8[%c0_17, %c0_18] : memref<1x256xf32, #tpu.memory_space<vmem>>, vector<1x256xf32>
    %25 = vector.broadcast %24 : vector<1x256xf32> to vector<8x256xf32>
    %26 = arith.addf %23, %25 : vector<8x256xf32>
    %cst_19 = arith.constant 0.000000e+00 : f32
    %27 = vector.broadcast %cst_19 : f32 to vector<8x256xf32>
    %28 = arith.maximumf %26, %27 : vector<8x256xf32>
    %29 = arith.truncf %28 : vector<8x256xf32> to vector<8x256xbf16>
    %c0_20 = arith.constant 0 : index
    %c0_21 = arith.constant 0 : index
    %30 = vector.load %arg9[%c0_20, %c0_21] : memref<256x4xbf16, #tpu.memory_space<vmem>>, vector<256x4xbf16>
    %cst_22 = arith.constant dense<0.000000e+00> : vector<8x4xf32>
    %31 = tpu.matmul %29, %30, %cst_22 {dimension_numbers = #tpu.dot_dimension_numbers<[1], [0], [0], [1], [0, 0, 1, 1], [], []>} : vector<8x256xbf16>, vector<256x4xbf16>, vector<8x4xf32> -> vector<8x4xf32>
    %c0_23 = arith.constant 0 : index
    %c0_24 = arith.constant 0 : index
    %32 = vector.load %arg10[%c0_23, %c0_24] : memref<1x4xf32, #tpu.memory_space<vmem>>, vector<1x4xf32>
    %33 = vector.broadcast %32 : vector<1x4xf32> to vector<8x4xf32>
    %34 = arith.addf %31, %33 : vector<8x4xf32>
    %35 = arith.negf %34 : vector<8x4xf32>
    %36 = math.exp %35 : vector<8x4xf32>
    %cst_25 = arith.constant 1.000000e+00 : f32
    %37 = vector.broadcast %cst_25 : f32 to vector<8x4xf32>
    %38 = arith.addf %37, %36 : vector<8x4xf32>
    %39 = arith.divf %37, %38 : vector<8x4xf32>
    %40 = arith.subf %39, %0 : vector<8x4xf32>
    %41 = arith.mulf %40, %40 : vector<8x4xf32>
    %42 = vector.shape_cast %41 : vector<8x4xf32> to vector<1x8x4xf32>
    %cst_26 = arith.constant dense<0.000000e+00> : vector<1xf32>
    %43 = vector.multi_reduction <add>, %42, %cst_26 [1, 2] : vector<1x8x4xf32> to vector<1xf32>
    %44 = vector.shape_cast %43 : vector<1xf32> to vector<1x1x1xf32>
    %45 = vector.extract %44[0, 0, 0] : f32 from vector<1x1x1xf32>
    %46 = arith.mulf %18, %18 : vector<8x32xf32>
    %cst_27 = arith.constant 1.000000e+00 : f32
    %47 = vector.broadcast %cst_27 : f32 to vector<8x32xf32>
    %48 = arith.addf %47, %15 : vector<8x32xf32>
    %49 = arith.mulf %14, %14 : vector<8x32xf32>
    %50 = arith.subf %48, %49 : vector<8x32xf32>
    %51 = arith.subf %50, %46 : vector<8x32xf32>
    %52 = vector.shape_cast %51 : vector<8x32xf32> to vector<1x8x32xf32>
    %cst_28 = arith.constant dense<0.000000e+00> : vector<1xf32>
    %53 = vector.multi_reduction <add>, %52, %cst_28 [1, 2] : vector<1x8x32xf32> to vector<1xf32>
    %54 = vector.shape_cast %53 : vector<1xf32> to vector<1x1x1xf32>
    %55 = vector.extract %54[0, 0, 0] : f32 from vector<1x1x1xf32>
    %cst_29 = arith.constant -5.000000e-01 : f32
    %56 = arith.mulf %cst_29, %55 : f32
    %c0_30 = arith.constant 0 : index
    %c0_31 = arith.constant 0 : index
    %57 = vector.load %arg11[%c0_30, %c0_31] : memref<8x32xf32, #tpu.memory_space<vmem>>, vector<8x32xf32>
    tpu.vector_store %arg11[%c0_30, %c0_31], %20 {strides = array<i32>} : memref<8x32xf32, #tpu.memory_space<vmem>>, vector<8x32xf32>,
    %58 = arith.addf %45, %56 : f32
    %c0_32 = arith.constant 0 : index
    %c0_33 = arith.constant 0 : index
    %59 = memref.load %arg12[%c0_32, %c0_33] : memref<1x1xf32, #tpu.memory_space<smem>>
    memref.store %58, %arg12[%c0_32, %c0_33] : memref<1x1xf32, #tpu.memory_space<smem>>
    return
  }
  func.func @transform_0(%arg0: i32) -> (i32, i32) {
    %c0_i32 = arith.constant 0 : i32
    %c0_i32_0 = arith.constant 0 : i32
    return %arg0, %c0_i32 : i32, i32
  }
  func.func @transform_1(%arg0: i32) -> (i32, i32) {
    %c0_i32 = arith.constant 0 : i32
    %c0_i32_0 = arith.constant 0 : i32
    return %arg0, %c0_i32 : i32, i32
  }
  func.func @transform_2(%arg0: i32) -> (i32, i32) {
    %c0_i32 = arith.constant 0 : i32
    %c0_i32_0 = arith.constant 0 : i32
    %c0_i32_1 = arith.constant 0 : i32
    return %c0_i32, %c0_i32_0 : i32, i32
  }
  func.func @transform_3(%arg0: i32) -> (i32, i32) {
    %c0_i32 = arith.constant 0 : i32
    %c0_i32_0 = arith.constant 0 : i32
    %c0_i32_1 = arith.constant 0 : i32
    return %c0_i32, %c0_i32_0 : i32, i32
  }
  func.func @transform_4(%arg0: i32) -> (i32, i32) {
    %c0_i32 = arith.constant 0 : i32
    %c0_i32_0 = arith.constant 0 : i32
    %c0_i32_1 = arith.constant 0 : i32
    return %c0_i32, %c0_i32_0 : i32, i32
  }
  func.func @transform_5(%arg0: i32) -> (i32, i32) {
    %c0_i32 = arith.constant 0 : i32
    %c0_i32_0 = arith.constant 0 : i32
    %c0_i32_1 = arith.constant 0 : i32
    return %c0_i32, %c0_i32_0 : i32, i32
  }
  func.func @transform_6(%arg0: i32) -> (i32, i32) {
    %c0_i32 = arith.constant 0 : i32
    %c0_i32_0 = arith.constant 0 : i32
    %c0_i32_1 = arith.constant 0 : i32
    return %c0_i32, %c0_i32_0 : i32, i32
  }
  func.func @transform_7(%arg0: i32) -> (i32, i32) {
    %c0_i32 = arith.constant 0 : i32
    %c0_i32_0 = arith.constant 0 : i32
    %c0_i32_1 = arith.constant 0 : i32
    return %c0_i32, %c0_i32_0 : i32, i32
  }
  func.func @transform_8(%arg0: i32) -> (i32, i32) {
    %c0_i32 = arith.constant 0 : i32
    %c0_i32_0 = arith.constant 0 : i32
    %c0_i32_1 = arith.constant 0 : i32
    return %c0_i32, %c0_i32_0 : i32, i32
  }
  func.func @transform_9(%arg0: i32) -> (i32, i32) {
    %c0_i32 = arith.constant 0 : i32
    %c0_i32_0 = arith.constant 0 : i32
    %c0_i32_1 = arith.constant 0 : i32
    return %c0_i32, %c0_i32_0 : i32, i32
  }
  func.func @transform_10(%arg0: i32) -> (i32, i32) {
    %c0_i32 = arith.constant 0 : i32
    %c0_i32_0 = arith.constant 0 : i32
    return %arg0, %c0_i32 : i32, i32
  }
  func.func @transform_11(%arg0: i32) -> (i32, i32) {
    %c0_i32 = arith.constant 0 : i32
    %c0_i32_0 = arith.constant 0 : i32
    return %arg0, %c0_i32 : i32, i32
  }
}

</mosaic_0001>

<llo_original>
// kernel: vae_forward.1
$region0: #{vae_forward.1}
  #allocation0 [shape = 'u32[]', space=smem, size = 0x4, offset = 0x4, fixed_abs, tag = 'smem constant byte address 0x4 - core index']
  #allocation1 [shape = 'u32[144,128]{1,0:T(1,128)}', space=vmem, size = 0x12000, scoped, tag = 'internal scratch']
  %s0 = inlined_call_operand.vmem [shape: f32[8,4], index: 0, kind: input, shape index: {}]
  %s1 = inlined_call_operand.vmem [shape: f32[8,32], index: 1, kind: input, shape index: {}]
  %s2 = inlined_call_operand.vmem [shape: f32[4,256], index: 2, kind: input, shape index: {}]
  %s3 = inlined_call_operand.vmem [shape: f32[1,256], index: 3, kind: input, shape index: {}]
  %s4 = inlined_call_operand.vmem [shape: f32[256,64], index: 4, kind: input, shape index: {}]
  %s5 = inlined_call_operand.vmem [shape: f32[1,64], index: 5, kind: input, shape index: {}]
  %s6 = inlined_call_operand.vmem [shape: bf16[32,256], index: 6, kind: input, shape index: {}]
  %s7 = inlined_call_operand.vmem [shape: f32[1,256], index: 7, kind: input, shape index: {}]
  %s8 = inlined_call_operand.vmem [shape: bf16[256,4], index: 8, kind: input, shape index: {}]
  %s9 = inlined_call_operand.vmem [shape: f32[1,4], index: 9, kind: input, shape index: {}]
  %s10 = inlined_call_operand.hbm [shape: f32[8,32], index: 10, kind: output, shape index: {0}]
  %s11 = inlined_call_operand.hbm [shape: f32[1,1], index: 11, kind: output, shape index: {1}]
  %12 = xla_tuple %s10, %s11
  %s13 = sld [smem:[#allocation0]]
  $region58: #{vae_forward.1} parent=0
    _
  %s15 = ssub.s32 1, %s13
  %s16 = scalar_select 0, %s15, %s13
  $region1: #{vae_forward.1} parent=0
    #allocation2 [shape = 'u8[4096]{0}', space=vmem, size = 0x1000, scoped, tag = 'output window, operand 0, single buffered']
    #allocation3 [shape = 's32[1]{0}', space=sflag, size = 0x4, scoped, tag = 'scoped memory for vae_forward.1']
    #allocation4 [shape = 's32[1]{0}', space=sflag, size = 0x4, scoped, tag = 'scoped memory for vae_forward.1']
    #allocation5 [shape = 'u8[512]{0}', space=smem, size = 0x200, scoped, tag = 'output window, operand 1, single buffered']
    %17 = vsyncpa [#allocation3], 0
    %18 = vsyncpa [#allocation4], 0
    // Predicated region
    $region2: #{vae_forward.1} parent=1 // pred_check
      _
    $region3: #{vae_forward.1} parent=1 // pred_check_branch
      %20 = sbr.rel (0) target = $region5
    $region4: #{vae_forward.1} parent=1 // pred_region
      _
    $region5: #{vae_forward.1} parent=1 // pred_fallthru
      _
    // Predicated region
    $region6: #{vae_forward.1} parent=1 // pred_check
      _
    $region7: #{vae_forward.1} parent=1 // pred_check_branch
      %22 = sbr.rel (0) target = $region9
    $region8: #{vae_forward.1} parent=1 // pred_region
      _
    $region9: #{vae_forward.1} parent=1 // pred_fallthru
      _
    // Predicated region
    $region10: #{vae_forward.1} parent=1 // pred_check
      _
    $region11: #{vae_forward.1} parent=1 // pred_check_branch
      %24 = sbr.rel (0) target = $region13
    $region12: #{vae_forward.1} parent=1 // pred_region
      _
    $region13: #{vae_forward.1} parent=1 // pred_fallthru
      _
    // Predicated region
    $region14: #{vae_forward.1} parent=1 // pred_check
      _
    $region15: #{vae_forward.1} parent=1 // pred_check_branch
      %26 = sbr.rel (0) target = $region17
    $region16: #{vae_forward.1} parent=1 // pred_region
      _
    $region17: #{vae_forward.1} parent=1 // pred_fallthru
      _
    // Predicated region
    $region18: #{vae_forward.1} parent=1 // pred_check
      _
    $region19: #{vae_forward.1} parent=1 // pred_check_branch
      %28 = sbr.rel (0) target = $region21
    $region20: #{vae_forward.1} parent=1 // pred_region
      _
    $region21: #{vae_forward.1} parent=1 // pred_fallthru
      _
    // Predicated region
    $region22: #{vae_forward.1} parent=1 // pred_check
      _
    $region23: #{vae_forward.1} parent=1 // pred_check_branch
      %30 = sbr.rel (0) target = $region25
    $region24: #{vae_forward.1} parent=1 // pred_region
      _
    $region25: #{vae_forward.1} parent=1 // pred_fallthru
      _
    // Predicated region
    $region26: #{vae_forward.1} parent=1 // pred_check
      _
    $region27: #{vae_forward.1} parent=1 // pred_check_branch
      %32 = sbr.rel (0) target = $region29
    $region28: #{vae_forward.1} parent=1 // pred_region
      _
    $region29: #{vae_forward.1} parent=1 // pred_fallthru
      _
    // Predicated region
    $region30: #{vae_forward.1} parent=1 // pred_check
      _
    $region31: #{vae_forward.1} parent=1 // pred_check_branch
      %34 = sbr.rel (0) target = $region33
    $region32: #{vae_forward.1} parent=1 // pred_region
      _
    $region33: #{vae_forward.1} parent=1 // pred_fallthru
      _
    // Predicated region
    $region34: #{vae_forward.1} parent=1 // pred_check
      _
    $region35: #{vae_forward.1} parent=1 // pred_check_branch
      %36 = sbr.rel (0) target = $region37
    $region36: #{vae_forward.1} parent=1 // pred_region
      _
    $region37: #{vae_forward.1} parent=1 // pred_fallthru
      _
    // Predicated region
    $region38: #{vae_forward.1} parent=1 // pred_check
      _
    $region39: #{vae_forward.1} parent=1 // pred_check_branch
      %38 = sbr.rel (0) target = $region41
    $region40: #{vae_forward.1} parent=1 // pred_region
      _
    $region41: #{vae_forward.1} parent=1 // pred_fallthru
      _
    %v40 = vld [vmem:[%s0] sm:$0xff]
    %v41 = vld [vmem:[%s1] sm:$0xff]
    %v42 = vld [vmem:[%s2] sm:$0xff]
    %v43 = vld [vmem:[%s3] sm:$0x3]
    %v45 = vlaneseq
    %v46 = vshrl.u32 %v45, 7
    %v47 = vsub.s32 0, %v46
    %v48 = vrot.slane %v43, %v47
    %v49 = vlaneseq
    %v50 = vshrl.u32 %v49, 7
    %v51 = vsub.s32 1, %v50
    %v52 = vrot.slane %v43, %v51
    %v56 = vcombine.high %v42, %v42
    %vm57 = vcmask 31744
    %v59 = vsel %vm57, %v40, 0
    %vm61 = vcmask 1043456
    %v62 = vsel %vm61, %v42, 0
    %v64 = vsel %vm61, %v56, 0
    %66 = vmatprep.subr.mxu0 %v64
    %67 = vmatpush1.msra.mxu0 %v62
    %68 = vmatprep.subr.mxu0 0.0
    %69 = vmatpush1.msra.mxu0 0.0
    %70 = vmatprep.subr.mxu0 0.0
    %71 = vmatpush1.msra.mxu0 0.0
    %72 = vmatprep.subr.mxu0 0.0
    %73 = vmatpush1.msra.mxu0 0.0
    %74 = vmatprep.subr.mxu0 0.0
    %75 = vmatpush1.msra.mxu0 0.0
    %76 = vmatprep.subr.mxu0 0.0
    %77 = vmatpush1.msra.mxu0 0.0
    %78 = vmatprep.subr.mxu0 0.0
    %79 = vmatpush1.msra.mxu0 0.0
    %80 = vmatprep.subr.mxu0 0.0
    %81 = vmatpush1.msra.mxu0 0.0
    %82 = vmatprep.subr.mxu0 0.0
    %83 = vmatpush1.msra.mxu0 0.0
    %84 = vmatprep.subr.mxu0 0.0
    %85 = vmatpush1.msra.mxu0 0.0
    %86 = vmatprep.subr.mxu0 0.0
    %87 = vmatpush1.msra.mxu0 0.0
    %88 = vmatprep.subr.mxu0 0.0
    %89 = vmatpush1.msra.mxu0 0.0
    %90 = vmatprep.subr.mxu0 0.0
    %91 = vmatpush1.msra.mxu0 0.0
    %92 = vmatprep.subr.mxu0 0.0
    %93 = vmatpush1.msra.mxu0 0.0
    %94 = vmatprep.subr.mxu0 0.0
    %95 = vmatpush1.msra.mxu0 0.0
    %96 = vmatprep.subr.mxu0 0.0
    %97 = vmatpush1.msra.mxu0 0.0
    %98 = vmatprep.subr.mxu0 0.0
    %99 = vmatpush1.msra.mxu0 0.0
    %100 = vmatprep.subr.mxu0 0.0
    %101 = vmatpush1.msra.mxu0 0.0
    %102 = vmatprep.subr.mxu0 0.0
    %103 = vmatpush1.msra.mxu0 0.0
    %104 = vmatprep.subr.mxu0 0.0
    %105 = vmatpush1.msra.mxu0 0.0
    %106 = vmatprep.subr.mxu0 0.0
    %107 = vmatpush1.msra.mxu0 0.0
    %108 = vmatprep.subr.mxu0 0.0
    %109 = vmatpush1.msra.mxu0 0.0
    %110 = vmatprep.subr.mxu0 0.0
    %111 = vmatpush1.msra.mxu0 0.0
    %112 = vmatprep.subr.mxu0 0.0
    %113 = vmatpush1.msra.mxu0 0.0
    %114 = vmatprep.subr.mxu0 0.0
    %115 = vmatpush1.msra.mxu0 0.0
    %116 = vmatprep.subr.mxu0 0.0
    %117 = vmatpush1.msra.mxu0 0.0
    %118 = vmatprep.subr.mxu0 0.0
    %119 = vmatpush1.msra.mxu0 0.0
    %120 = vmatprep.subr.mxu0 0.0
    %121 = vmatpush1.msra.mxu0 0.0
    %122 = vmatprep.subr.mxu0 0.0
    %123 = vmatpush1.msra.mxu0 0.0
    %124 = vmatprep.subr.mxu0 0.0
    %125 = vmatpush1.msra.mxu0 0.0
    %126 = vmatprep.subr.mxu0 0.0
    %127 = vmatpush1.msra.mxu0 0.0
    %128 = vmatprep.subr.mxu0 0.0
    %129 = vmatpush1.msra.mxu0 0.0
    %130 = vmatprep.mubr.f32.mxu0 0.0
    %131 = vmatmul.mubr.f32.gmra.mrb[0].mxu0 %v59
    %v132 = vpop.f32.mrb[0].mxu0
    %v133 = vadd.f32 %v48, %v132
    %v134 = vpop.f32.mrb[0].mxu0
    %v135 = vadd.f32 %v52, %v134
    %136 = vdwg.mxu0
    %v137 = vmax.f32 %v133, 0.0
    %v138 = vmax.f32 %v135, 0.0
    %v139 = vld [vmem:[%s4] sm:$0xff]
    %v140 = vld [vmem:[%s4 + $0x8] sm:$0xff]
    %v141 = vld [vmem:[%s4 + $0x10] sm:$0xff]
    %v142 = vld [vmem:[%s4 + $0x18] sm:$0xff]
    %v143 = vld [vmem:[%s4 + $0x20] sm:$0xff]
    %v144 = vld [vmem:[%s4 + $0x28] sm:$0xff]
    %v145 = vld [vmem:[%s4 + $0x30] sm:$0xff]
    %v146 = vld [vmem:[%s4 + $0x38] sm:$0xff]
    %v147 = vld [vmem:[%s4 + $0x40] sm:$0xff]
    %v148 = vld [vmem:[%s4 + $0x48] sm:$0xff]
    %v149 = vld [vmem:[%s4 + $0x50] sm:$0xff]
    %v150 = vld [vmem:[%s4 + $0x58] sm:$0xff]
    %v151 = vld [vmem:[%s4 + $0x60] sm:$0xff]
    %v152 = vld [vmem:[%s4 + $0x68] sm:$0xff]
    %v153 = vld [vmem:[%s4 + $0x70] sm:$0xff]
    %v154 = vld [vmem:[%s4 + $0x78] sm:$0xff]
    %v155 = vld [vmem:[%s4 + $0x80] sm:$0xff]
    %v156 = vld [vmem:[%s4 + $0x88] sm:$0xff]
    %v157 = vld [vmem:[%s4 + $0x90] sm:$0xff]
    %v158 = vld [vmem:[%s4 + $0x98] sm:$0xff]
    %v159 = vld [vmem:[%s4 + $0xa0] sm:$0xff]
    %v160 = vld [vmem:[%s4 + $0xa8] sm:$0xff]
    %v161 = vld [vmem:[%s4 + $0xb0] sm:$0xff]
    %v162 = vld [vmem:[%s4 + $0xb8] sm:$0xff]
    %v163 = vld [vmem:[%s4 + $0xc0] sm:$0xff]
    %v164 = vld [vmem:[%s4 + $0xc8] sm:$0xff]
    %v165 = vld [vmem:[%s4 + $0xd0] sm:$0xff]
    %v166 = vld [vmem:[%s4 + $0xd8] sm:$0xff]
    %v167 = vld [vmem:[%s4 + $0xe0] sm:$0xff]
    %v168 = vld [vmem:[%s4 + $0xe8] sm:$0xff]
    %v169 = vld [vmem:[%s4 + $0xf0] sm:$0xff]
    %v170 = vld [vmem:[%s4 + $0xf8] sm:$0xff]
    %v171 = vld [vmem:[%s5] sm:$0x1]
    %v173 = vlaneseq
    %v174 = vshrl.u32 %v173, 7
    %v175 = vsub.s32 0, %v174
    %v176 = vrot.slane %v171, %v175
    %178 = vmatprep.subr.mxu0 0.0
    %179 = vmatpush1.msra.mxu0 %v139
    %180 = vmatprep.subr.mxu0 0.0
    %181 = vmatpush1.msra.mxu0 %v140
    %182 = vmatprep.subr.mxu0 0.0
    %183 = vmatpush1.msra.mxu0 %v141
    %184 = vmatprep.subr.mxu0 0.0
    %185 = vmatpush1.msra.mxu0 %v142
    %186 = vmatprep.subr.mxu0 0.0
    %187 = vmatpush1.msra.mxu0 %v143
    %188 = vmatprep.subr.mxu0 0.0
    %189 = vmatpush1.msra.mxu0 %v144
    %190 = vmatprep.subr.mxu0 0.0
    %191 = vmatpush1.msra.mxu0 %v145
    %192 = vmatprep.subr.mxu0 0.0
    %193 = vmatpush1.msra.mxu0 %v146
    %194 = vmatprep.subr.mxu0 0.0
    %195 = vmatpush1.msra.mxu0 %v147
    %196 = vmatprep.subr.mxu0 0.0
    %197 = vmatpush1.msra.mxu0 %v148
    %198 = vmatprep.subr.mxu0 0.0
    %199 = vmatpush1.msra.mxu0 %v149
    %200 = vmatprep.subr.mxu0 0.0
    %201 = vmatpush1.msra.mxu0 %v150
    %202 = vmatprep.subr.mxu0 0.0
    %203 = vmatpush1.msra.mxu0 %v151
    %204 = vmatprep.subr.mxu0 0.0
    %205 = vmatpush1.msra.mxu0 %v152
    %206 = vmatprep.subr.mxu0 0.0
    %207 = vmatpush1.msra.mxu0 %v153
    %208 = vmatprep.subr.mxu0 0.0
    %209 = vmatpush1.msra.mxu0 %v154
    %210 = vmatprep.subr.mxu0 0.0
    %211 = vmatpush1.msra.mxu0 %v155
    %212 = vmatprep.subr.mxu0 0.0
    %213 = vmatpush1.msra.mxu0 %v156
    %214 = vmatprep.subr.mxu0 0.0
    %215 = vmatpush1.msra.mxu0 %v157
    %216 = vmatprep.subr.mxu0 0.0
    %217 = vmatpush1.msra.mxu0 %v158
    %218 = vmatprep.subr.mxu0 0.0
    %219 = vmatpush1.msra.mxu0 %v159
    %220 = vmatprep.subr.mxu0 0.0
    %221 = vmatpush1.msra.mxu0 %v160
    %222 = vmatprep.subr.mxu0 0.0
    %223 = vmatpush1.msra.mxu0 %v161
    %224 = vmatprep.subr.mxu0 0.0
    %225 = vmatpush1.msra.mxu0 %v162
    %226 = vmatprep.subr.mxu0 0.0
    %227 = vmatpush1.msra.mxu0 %v163
    %228 = vmatprep.subr.mxu0 0.0
    %229 = vmatpush1.msra.mxu0 %v164
    %230 = vmatprep.subr.mxu0 0.0
    %231 = vmatpush1.msra.mxu0 %v165
    %232 = vmatprep.subr.mxu0 0.0
    %233 = vmatpush1.msra.mxu0 %v166
    %234 = vmatprep.subr.mxu0 0.0
    %235 = vmatpush1.msra.mxu0 %v167
    %236 = vmatprep.subr.mxu0 0.0
    %237 = vmatpush1.msra.mxu0 %v168
    %238 = vmatprep.subr.mxu0 0.0
    %239 = vmatpush1.msra.mxu0 %v169
    %240 = vmatprep.subr.mxu0 0.0
    %241 = vmatpush1.msra.mxu0 %v170
    %242 = vmatprep.mubr.f32.mxu0 %v138
    %243 = vmatmul.mubr.f32.gmra.mrb[0].mxu0 %v137
    %v244 = vpop.f32.mrb[0].mxu0
    %v245 = vadd.f32 %v176, %v244
    %v246 = vpop.f32.mrb[0].mxu0
    %247 = vdwg.mxu0
    %v248 = vmul.f32 %v245, 0.5
    %v249 = vmul.f32 %v248, 1.442695
    %v250 = vpow.pop %v249
    %252 = vrot.lane.b32.xlu0 %v250, 96
    %v253 = vpop.permute.xlu0 %252
    %v255 = vmul.f32 %v41, %v253
    %v256 = vadd.f32 %v245, %v255
    %v257 = vpack.c.bf16 %v256, %v256
    %v258 = vld [vmem:[%s6] sm:$0xff]
    %v259 = vld [vmem:[%s6 + $0x8] sm:$0xff]
    %v260 = vld [vmem:[%s6 + $0x10] sm:$0xff]
    %v261 = vld [vmem:[%s6 + $0x18] sm:$0xff]
    %v262 = vld [vmem:[%s7] sm:$0x3]
    %v264 = vlaneseq
    %v265 = vshrl.u32 %v264, 7
    %v266 = vsub.s32 0, %v265
    %v267 = vrot.slane %v262, %v266
    %v268 = vlaneseq
    %v269 = vshrl.u32 %v268, 7
    %v270 = vsub.s32 1, %v269
    %v271 = vrot.slane %v262, %v270
    %v278 = vunpack.c.l.b16 %v258
    %v279 = vunpack.c.h.b16 %v258
    %v280 = vunpack.c.l.b16 %v259
    %v281 = vunpack.c.h.b16 %v259
    %v282 = vunpack.c.l.b16 %v260
    %v283 = vunpack.c.h.b16 %v260
    %v284 = vunpack.c.l.b16 %v261
    %v285 = vunpack.c.h.b16 %v261
    %v286 = vpack.c.b16 %v280, %v278
    %v287 = vpack.c.b16 %v281, %v279
    %v288 = vpack.c.b16 %v284, %v282
    %v289 = vpack.c.b16 %v285, %v283
    %vm294 = vcmask 261120
    %v296 = vsel %vm294, %v257, 0
    %298 = vmatprep.subr.bf16.mxu0 %v287
    %299 = vmatpush1.bf16.msra.mxu0 %v286
    %300 = vmatprep.subr.bf16.mxu0 %v289
    %301 = vmatpush1.bf16.msra.mxu0 %v288
    %302 = vmatprep.subr.bf16.mxu0 0
    %303 = vmatpush1.bf16.msra.mxu0 0
    %304 = vmatprep.subr.bf16.mxu0 0
    %305 = vmatpush1.bf16.msra.mxu0 0
    %306 = vmatprep.subr.bf16.mxu0 0
    %307 = vmatpush1.bf16.msra.mxu0 0
    %308 = vmatprep.subr.bf16.mxu0 0
    %309 = vmatpush1.bf16.msra.mxu0 0
    %310 = vmatprep.subr.bf16.mxu0 0
    %311 = vmatpush1.bf16.msra.mxu0 0
    %312 = vmatprep.subr.bf16.mxu0 0
    %313 = vmatpush1.bf16.msra.mxu0 0
    %314 = vmatprep.subr.bf16.mxu0 0
    %315 = vmatpush1.bf16.msra.mxu0 0
    %316 = vmatprep.subr.bf16.mxu0 0
    %317 = vmatpush1.bf16.msra.mxu0 0
    %318 = vmatprep.subr.bf16.mxu0 0
    %319 = vmatpush1.bf16.msra.mxu0 0
    %320 = vmatprep.subr.bf16.mxu0 0
    %321 = vmatpush1.bf16.msra.mxu0 0
    %322 = vmatprep.subr.bf16.mxu0 0
    %323 = vmatpush1.bf16.msra.mxu0 0
    %324 = vmatprep.subr.bf16.mxu0 0
    %325 = vmatpush1.bf16.msra.mxu0 0
    %326 = vmatprep.subr.bf16.mxu0 0
    %327 = vmatpush1.bf16.msra.mxu0 0
    %328 = vmatprep.subr.bf16.mxu0 0
    %329 = vmatpush1.bf16.msra.mxu0 0
    %330 = vmatprep.mubr.bf16.mxu0 0
    %331 = vmatmul.mubr.bf16.gmra.mrb[0].mxu0 %v296
    %v332 = vpop.f32.mrb[0].mxu0
    %v333 = vadd.f32 %v267, %v332
    %v334 = vpop.f32.mrb[0].mxu0
    %v335 = vadd.f32 %v271, %v334
    %v336 = vpop.f32.mrb[0].mxu0
    %v337 = vpop.f32.mrb[0].mxu0
    %338 = vdwg.mxu0
    %v339 = vmax.f32 %v333, 0.0
    %v340 = vmax.f32 %v335, 0.0
    %v341 = vpack.c.bf16 %v339, %v339
    %v342 = vpack.c.bf16 %v340, %v340
    %v343 = vld [vmem:[%s8] sm:$0xf]
    %v344 = vld [vmem:[%s8 + $0x4] sm:$0xf]
    %v345 = vld [vmem:[%s8 + $0x8] sm:$0xf]
    %v346 = vld [vmem:[%s8 + $0xc] sm:$0xf]
    %v347 = vld [vmem:[%s8 + $0x10] sm:$0xf]
    %v348 = vld [vmem:[%s8 + $0x14] sm:$0xf]
    %v349 = vld [vmem:[%s8 + $0x18] sm:$0xf]
    %v350 = vld [vmem:[%s8 + $0x1c] sm:$0xf]
    %v351 = vld [vmem:[%s8 + $0x20] sm:$0xf]
    %v352 = vld [vmem:[%s8 + $0x24] sm:$0xf]
    %v353 = vld [vmem:[%s8 + $0x28] sm:$0xf]
    %v354 = vld [vmem:[%s8 + $0x2c] sm:$0xf]
    %v355 = vld [vmem:[%s8 + $0x30] sm:$0xf]
    %v356 = vld [vmem:[%s8 + $0x34] sm:$0xf]
    %v357 = vld [vmem:[%s8 + $0x38] sm:$0xf]
    %v358 = vld [vmem:[%s8 + $0x3c] sm:$0xf]
    %v359 = vld [vmem:[%s8 + $0x40] sm:$0xf]
    %v360 = vld [vmem:[%s8 + $0x44] sm:$0xf]
    %v361 = vld [vmem:[%s8 + $0x48] sm:$0xf]
    %v362 = vld [vmem:[%s8 + $0x4c] sm:$0xf]
    %v363 = vld [vmem:[%s8 + $0x50] sm:$0xf]
    %v364 = vld [vmem:[%s8 + $0x54] sm:$0xf]
    %v365 = vld [vmem:[%s8 + $0x58] sm:$0xf]
    %v366 = vld [vmem:[%s8 + $0x5c] sm:$0xf]
    %v367 = vld [vmem:[%s8 + $0x60] sm:$0xf]
    %v368 = vld [vmem:[%s8 + $0x64] sm:$0xf]
    %v369 = vld [vmem:[%s8 + $0x68] sm:$0xf]
    %v370 = vld [vmem:[%s8 + $0x6c] sm:$0xf]
    %v371 = vld [vmem:[%s8 + $0x70] sm:$0xf]
    %v372 = vld [vmem:[%s8 + $0x74] sm:$0xf]
    %v373 = vld [vmem:[%s8 + $0x78] sm:$0xf]
    %v374 = vld [vmem:[%s8 + $0x7c] sm:$0xf]
    %v375 = vld [vmem:[%s9] sm:$0x1]
    %v377 = vlaneseq
    %v378 = vshrl.u32 %v377, 7
    %v379 = vsub.s32 0, %v378
    %v380 = vrot.slane %v375, %v379
    %v414 = vunpack.c.l.b16 %v343
    %v415 = vunpack.c.l.b16 %v344
    %v416 = vunpack.c.l.b16 %v345
    %v417 = vunpack.c.l.b16 %v346
    %v418 = vunpack.c.l.b16 %v347
    %v419 = vunpack.c.l.b16 %v348
    %v420 = vunpack.c.l.b16 %v349
    %v421 = vunpack.c.l.b16 %v350
    %v422 = vunpack.c.l.b16 %v351
    %v423 = vunpack.c.l.b16 %v352
    %v424 = vunpack.c.l.b16 %v353
    %v425 = vunpack.c.l.b16 %v354
    %v426 = vunpack.c.l.b16 %v355
    %v427 = vunpack.c.l.b16 %v356
    %v428 = vunpack.c.l.b16 %v357
    %v429 = vunpack.c.l.b16 %v358
    %v430 = vunpack.c.l.b16 %v359
    %v431 = vunpack.c.l.b16 %v360
    %v432 = vunpack.c.l.b16 %v361
    %v433 = vunpack.c.l.b16 %v362
    %v434 = vunpack.c.l.b16 %v363
    %v435 = vunpack.c.l.b16 %v364
    %v436 = vunpack.c.l.b16 %v365
    %v437 = vunpack.c.l.b16 %v366
    %v438 = vunpack.c.l.b16 %v367
    %v439 = vunpack.c.l.b16 %v368
    %v440 = vunpack.c.l.b16 %v369
    %v441 = vunpack.c.l.b16 %v370
    %v442 = vunpack.c.l.b16 %v371
    %v443 = vunpack.c.l.b16 %v372
    %v444 = vunpack.c.l.b16 %v373
    %v445 = vunpack.c.l.b16 %v374
    %v446 = vpack.c.b16 %v415, %v414
    %v447 = vpack.c.b16 %v417, %v416
    %v448 = vpack.c.b16 %v419, %v418
    %v449 = vpack.c.b16 %v421, %v420
    %v450 = vpack.c.b16 %v423, %v422
    %v451 = vpack.c.b16 %v425, %v424
    %v452 = vpack.c.b16 %v427, %v426
    %v453 = vpack.c.b16 %v429, %v428
    %v454 = vpack.c.b16 %v431, %v430
    %v455 = vpack.c.b16 %v433, %v432
    %v456 = vpack.c.b16 %v435, %v434
    %v457 = vpack.c.b16 %v437, %v436
    %v458 = vpack.c.b16 %v439, %v438
    %v459 = vpack.c.b16 %v441, %v440
    %v460 = vpack.c.b16 %v443, %v442
    %v461 = vpack.c.b16 %v445, %v444
    %478 = vmatprep.subr.bf16.mxu0 0
    %479 = vmatpush1.bf16.msra.mxu0 %v446
    %480 = vmatprep.subr.bf16.mxu0 0
    %481 = vmatpush1.bf16.msra.mxu0 %v447
    %482 = vmatprep.subr.bf16.mxu0 0
    %483 = vmatpush1.bf16.msra.mxu0 %v448
    %484 = vmatprep.subr.bf16.mxu0 0
    %485 = vmatpush1.bf16.msra.mxu0 %v449
    %486 = vmatprep.subr.bf16.mxu0 0
    %487 = vmatpush1.bf16.msra.mxu0 %v450
    %488 = vmatprep.subr.bf16.mxu0 0
    %489 = vmatpush1.bf16.msra.mxu0 %v451
    %490 = vmatprep.subr.bf16.mxu0 0
    %491 = vmatpush1.bf16.msra.mxu0 %v452
    %492 = vmatprep.subr.bf16.mxu0 0
    %493 = vmatpush1.bf16.msra.mxu0 %v453
    %494 = vmatprep.subr.bf16.mxu0 0
    %495 = vmatpush1.bf16.msra.mxu0 %v454
    %496 = vmatprep.subr.bf16.mxu0 0
    %497 = vmatpush1.bf16.msra.mxu0 %v455
    %498 = vmatprep.subr.bf16.mxu0 0
    %499 = vmatpush1.bf16.msra.mxu0 %v456
    %500 = vmatprep.subr.bf16.mxu0 0
    %501 = vmatpush1.bf16.msra.mxu0 %v457
    %502 = vmatprep.subr.bf16.mxu0 0
    %503 = vmatpush1.bf16.msra.mxu0 %v458
    %504 = vmatprep.subr.bf16.mxu0 0
    %505 = vmatpush1.bf16.msra.mxu0 %v459
    %506 = vmatprep.subr.bf16.mxu0 0
    %507 = vmatpush1.bf16.msra.mxu0 %v460
    %508 = vmatprep.subr.bf16.mxu0 0
    %509 = vmatpush1.bf16.msra.mxu0 %v461
    %510 = vmatprep.mubr.bf16.mxu0 %v342
    %511 = vmatmul.mubr.bf16.gmra.mrb[0].mxu0 %v341
    %v512 = vpop.f32.mrb[0].mxu0
    %v513 = vadd.f32 %v380, %v512
    %v514 = vpop.f32.mrb[0].mxu0
    %v515 = vpop.f32.mrb[0].mxu0
    %v516 = vpop.f32.mrb[0].mxu0
    %517 = vdwg.mxu0
    %v518 = vxor.u32 %v513, 2147483648
    %v519 = vmul.f32 %v518, 1.442695
    %v520 = vpow.pop %v519
    %v521 = vadd.f32 %v520, 1.0
    %v522 = vrcp.pop %v521
    %v523 = vmul.f32 1.0, %v522
    %v524 = vsub.f32 %v523, %v40
    %v525 = vmul.f32 %v524, %v524
    %v526 = vsel %vm57, %v525, 0.0
    %527 = vadd.xlane.f32.xlu0 %v526
    %v528 = vpop.xlane.xlu0 %527
    %v529 = vrot.slane %v528, 4
    %v530 = vadd.f32 %v528, %v529
    %v531 = vrot.slane %v530, 2
    %v532 = vadd.f32 %v530, %v531
    %v533 = vrot.slane %v532, 1
    %v534 = vadd.f32 %v532, %v533
    %s535 = vtos %v534
    %v536 = vmul.f32 %v250, %v250
    %v537 = vadd.f32 %v245, 1.0
    %v538 = vmul.f32 %v245, %v245
    %540 = vrot.lane.b32.xlu0 %v538, 32
    %v541 = vpop.permute.xlu0 %540
    %v543 = vsub.f32 %v537, %v541
    %v544 = vsub.f32 %v543, %v536
    %546 = vrot.lane.b32.xlu0 %v544, 96
    %v547 = vpop.permute.xlu0 %546
    %v549 = vsel %vm294, %v547, 0.0
    %550 = vadd.xlane.f32.xlu0 %v549
    %v551 = vpop.xlane.xlu0 %550
    %v552 = vrot.slane %v551, 4
    %v553 = vadd.f32 %v551, %v552
    %v554 = vrot.slane %v553, 2
    %v555 = vadd.f32 %v553, %v554
    %v556 = vrot.slane %v555, 1
    %v557 = vadd.f32 %v555, %v556
    %s558 = vtos %v557
    %s559 = smul.f32 %s558, -0.5
    %560 = vst.msk [vmem:[#allocation2] sm:$0xff] %vm294, %v256
    %s561 = sadd.f32 %s535, %s559
    %s562 = scalar_lea.smem [#allocation5], 0
    %563 = sst [smem:[%s562]] %s561
    // Predicated region
    $region42: #{vae_forward.1} parent=1 // pred_check
      _
    $region43: #{vae_forward.1} parent=1 // pred_check_branch
      %565 = sbr.rel (0) target = $region45
    $region44: #{vae_forward.1} parent=1 // pred_region
      %s567 = ssub.s32 128, 128
      %568 = vsyncadd [#allocation3], %s567
      %s570 = sshll.u32 [#allocation2], 4
      %s571 = int_to_ptr.vmem [resolvable:$true] %s570
      %573 = dma.vmem_to_hbm [thread:$0]  %s571, 128, %s10, [#allocation3]
    $region45: #{vae_forward.1} parent=1 // pred_fallthru
      _
    // Predicated region
    $region46: #{vae_forward.1} parent=1 // pred_check
      _
    $region47: #{vae_forward.1} parent=1 // pred_check_branch
      %575 = sbr.rel (0) target = $region49
    $region48: #{vae_forward.1} parent=1 // pred_region
      %s577 = ssub.s32 16, 16
      %578 = vsyncadd [#allocation4], %s577
      %581 = dma.smem_to_hbm [#allocation5], 16, %s11, [#allocation4]
    $region49: #{vae_forward.1} parent=1 // pred_fallthru
      _
    // Predicated region
    $region50: #{vae_forward.1} parent=1 // pred_check
      _
    $region51: #{vae_forward.1} parent=1 // pred_check_branch
      %583 = sbr.rel (0) target = $region53
    $region52: #{vae_forward.1} parent=1 // pred_region
      %584 = dma.done [#allocation3], 128
    $region53: #{vae_forward.1} parent=1 // pred_fallthru
      _
    // Predicated region
    $region54: #{vae_forward.1} parent=1 // pred_check
      _
    $region55: #{vae_forward.1} parent=1 // pred_check_branch
      %586 = sbr.rel (0) target = $region57
    $region56: #{vae_forward.1} parent=1 // pred_region
      %587 = dma.done [#allocation4], 16
    $region57: #{vae_forward.1} parent=1 // pred_fallthru
      _
    %588 = sfence
    %589 = vsyncpa [#allocation3], 1
    %590 = vsyncpa [#allocation4], 1

</llo_original>
